<compile_context>
chip_gen: v7x
topology: tpu7x:2x2x1
jax: 0.10.0
libtpu: 0.0.40
codegen_flags: <defaults>
</compile_context>

<pallas_src>
import math

import jax
import jax.numpy as jnp
from jax.experimental import pallas as pl
from jax.experimental.pallas import tpu as pltpu


def _round_up(x, m):
    return ((x + m - 1) // m) * m


def _cdiv(a, b):
    return -(-a // b)


def _largest_divisor_tile(n, desired, aligns=(256, 128, 8, 1)):
    """Largest divisor of n that is <= desired, preferring MXU-friendly sizes."""
    desired = max(1, min(desired, n))
    for align in aligns:
        best = 0
        for t in range(align, desired + 1, align):
            if n % t == 0:
                best = t
        if best:
            return best
    return n


def _gelu_tanh(x):
    # PyTorch nn.GELU(approximate='tanh'):
    # 0.5 * x * (1 + tanh(sqrt(2/pi) * (x + 0.044715 * x^3)))
    c = jnp.float32(math.sqrt(2.0 / math.pi))
    return 0.5 * x * (1.0 + jnp.tanh(c * (x + 0.044715 * (x * (x * x)))))


def _make_mlp_kernel(th, tsub, n_split, use_scratch):
    lane_align = 128 if tsub % 128 == 0 else (8 if tsub % 8 == 0 else 1)

    def kernel(x_ref, wfc_ref, bfc_ref, wproj_ref, bproj_ref, o_ref, *scratch):
        # f32 accumulator: the resident output block itself when the output is
        # f32, otherwise a dedicated VMEM scratch.
        acc_ref = scratch[0] if use_scratch else o_ref
        h_idx = pl.program_id(1)

        @pl.when(h_idx == 0)
        def _init():
            acc_ref[...] = jnp.zeros_like(acc_ref)

        x = x_ref[...]            # (tm, C) in the MXU operand dtype
        bfc = bfc_ref[...]        # (1, th) f32
        base = h_idx * th

        # n_split independent (c_fc -> GELU -> c_proj) chains over tsub hidden
        # columns each; chain s+1's first matmul (MXU) can overlap chain s's
        # GELU (VPU/EUP) since they only meet at the accumulator.
        for s in range(n_split):
            off = base + s * tsub
            if lane_align > 1:
                off = pl.multiple_of(off, lane_align)
            w1 = wfc_ref[:, pl.ds(off, tsub)]          # (C, tsub), VMEM-resident
            h = jnp.dot(x, w1, preferred_element_type=jnp.float32)
            h = _gelu_tanh(h + bfc[:, s * tsub:(s + 1) * tsub])
            w2 = wproj_ref[pl.ds(off, tsub), :]        # (tsub, C), VMEM-resident
            acc_ref[...] += jnp.dot(h.astype(w2.dtype), w2,
                                    preferred_element_type=jnp.float32)

        @pl.when(h_idx == pl.num_programs(1) - 1)
        def _finalize():
            # b_proj added exactly once, at the last reduction step.
            if use_scratch:
                o_ref[...] = (acc_ref[...] + bproj_ref[...]).astype(o_ref.dtype)
            else:
                o_ref[...] = acc_ref[...] + bproj_ref[...]

    return kernel


def mlp_pallas(x, w_fc, b_fc, w_proj, b_proj, *, tm=512, th=512,
               mxu_dtype=None, vmem_limit_bytes=None):
    """x: (B, T, C); w_fc: (C, H); b_fc: (H,); w_proj: (H, C); b_proj: (C,).

    `mxu_dtype=jnp.bfloat16` casts only the matmul operands (recommended on
    v6e/v7x); GELU, biases and accumulation remain f32.
    """
    B, T, C = x.shape
    Cin, H = w_fc.shape
    assert Cin == C and w_proj.shape == (H, C)
    assert b_fc.shape == (H,) and b_proj.shape == (C,)
    M = B * T
    out_dtype = x.dtype

    op_dtype = jnp.dtype(mxu_dtype) if mxu_dtype is not None else jnp.dtype(x.dtype)
    op_itemsize = op_dtype.itemsize
    out_itemsize = jnp.dtype(out_dtype).itemsize

    # ---------------- tile selection ----------------
    # Sublane multiple for packed layouts: 8 (f32) / 16 (bf16) / 32 (8-bit).
    sub = 8 if op_itemsize >= 4 else (16 if op_itemsize == 2 else 32)
    tm = max(sub, min(_round_up(tm, sub), _round_up(M, sub)))
    ntiles = _cdiv(M, tm)
    if ntiles < 2 and tm > sub and M > sub:
        ntiles = 2  # let the "parallel" row axis split across v7x's two TCs
    tm = _round_up(_cdiv(M, ntiles), sub)
    ntiles = _cdiv(M, tm)
    M_pad = ntiles * tm

    th = _largest_divisor_tile(H, th)
    if th < 128 and H <= 4096:
        th = H  # tiny / oddly-sized hidden dims: one hidden block
    if th % 256 == 0:
        n_split, tsub = 2, th // 2   # overlap GELU with the next c_fc matmul
    else:
        n_split, tsub = 1, th
    use_scratch = jnp.dtype(out_dtype) != jnp.dtype(jnp.float32)

    # ---------------- operands ----------------
    x2 = x.reshape(M, C)
    if M_pad != M:
        x2 = jnp.pad(x2, ((0, M_pad - M), (0, 0)))
    x2 = x2.astype(op_dtype)
    w_fc = w_fc.astype(op_dtype)
    w_proj = w_proj.astype(op_dtype)
    bfc2 = b_fc.reshape(1, H).astype(jnp.float32)
    bproj2 = b_proj.reshape(1, C).astype(jnp.float32)

    grid = (M_pad // tm, H // th)

    # ---------------- VMEM budget ----------------
    resident = 2 * C * H * op_itemsize + (H + C) * 4            # weights + biases
    pipelined = 2 * tm * C * (op_itemsize + out_itemsize) + 2 * (th + C) * 4
    scratch_b = tm * C * 4 if use_scratch else 0
    working = 4 * tm * tsub * 4                                  # h blocks / casts headroom
    need = resident + pipelined + scratch_b + working
    if vmem_limit_bytes is None:
        vmem_limit_bytes = int(need * 1.25) + (8 << 20)
        try:
            phys = int(getattr(pltpu.get_tpu_info(), "vmem_capacity_bytes", 64 << 20))
        except Exception:
            phys = 64 << 20          # conservative fallback: v7x physical VMEM
        vmem_limit_bytes = min(vmem_limit_bytes, (phys // 4) * 3)
        vmem_limit_bytes = max(vmem_limit_bytes, 32 << 20)

    cost = pl.CostEstimate(
        flops=4 * M_pad * C * H,                # two matmuls: 2*M*C*H each
        transcendentals=M_pad * H,              # tanh per hidden activation
        bytes_accessed=(M_pad * C * (op_itemsize + out_itemsize)
                        + 2 * C * H * op_itemsize + (H + C) * 4),
    )

    kernel = _make_mlp_kernel(th, tsub, n_split, use_scratch)

    out2 = pl.pallas_call(
        kernel,
        out_shape=jax.ShapeDtypeStruct((M_pad, C), out_dtype),
        grid_spec=pltpu.PrefetchScalarGridSpec(
            num_scalar_prefetch=0,
            grid=grid,
            in_specs=[
                pl.BlockSpec((tm, C), lambda i, h: (i, 0)),          # x row tile
                pl.BlockSpec(memory_space=pltpu.MemorySpace.VMEM),   # w_fc: resident
                pl.BlockSpec((1, th), lambda i, h: (0, h)),          # b_fc H-block
                pl.BlockSpec(memory_space=pltpu.MemorySpace.VMEM),   # w_proj: resident
                pl.BlockSpec((1, C), lambda i, h: (0, 0)),           # b_proj
            ],
            # Same output block across the h axis -> accumulator resident.
            out_specs=pl.BlockSpec((tm, C), lambda i, h: (i, 0)),
            scratch_shapes=((pltpu.VMEM((tm, C), jnp.float32),) if use_scratch else ()),
        ),
        compiler_params=pltpu.CompilerParams(
            dimension_semantics=("parallel", "arbitrary"),
            vmem_limit_bytes=vmem_limit_bytes),
        cost_estimate=cost,
    )(x2, w_fc, bfc2, w_proj, bproj2)

    if M_pad != M:
        out2 = out2[:M]
    return out2.reshape(B, T, C)


def mlp_reference(x, w_fc, b_fc, w_proj, b_proj):
    h = jnp.dot(x, w_fc) + b_fc
    h = _gelu_tanh(h)
    return jnp.dot(h, w_proj) + b_proj


if __name__ == "__main__":
    # Toy config implied by the module: n_embd -> 4*n_embd -> n_embd
    B, T, C = 2, 8, 32
    H = 4 * C

    key = jax.random.PRNGKey(0)
    kx, kw1, kb1, kw2, kb2 = jax.random.split(key, 5)

    x = jax.random.normal(kx, (B, T, C), dtype=jnp.float32)

    # GPT-2-style init (std=0.02; NANOGPT_SCALE_INIT rescaling is a model-level
    # init detail, not part of the forward pass).
    w_fc = 0.02 * jax.random.normal(kw1, (C, H), dtype=jnp.float32)
    b_fc = 0.02 * jax.random.normal(kb1, (H,), dtype=jnp.float32)
    w_proj = 0.02 * jax.random.normal(kw2, (H, C), dtype=jnp.float32)
    b_proj = 0.02 * jax.random.normal(kb2, (C,), dtype=jnp.float32)

    ref = mlp_reference(x, w_fc, b_fc, w_proj, b_proj)

    # f32 path (exact vs reference; accumulates directly into the f32 output block).
    out = jax.block_until_ready(mlp_pallas(x, w_fc, b_fc, w_proj, b_proj))
    assert out.shape == (B, T, C)
    assert jnp.allclose(out, ref, atol=1e-5, rtol=1e-5)

    # bf16 MXU-operand path (v6e/v7x recommendation): f32 GELU + accumulation.
    out_bf = jax.block_until_ready(
        mlp_pallas(x, w_fc, b_fc, w_proj, b_proj, mxu_dtype=jnp.bfloat16))
    assert jnp.allclose(out_bf, ref, atol=2e-2, rtol=2e-2)

    # bf16 activations end-to-end (exercises the f32 scratch-accumulator path).
    out_bf_io = jax.block_until_ready(
        mlp_pallas(x.astype(jnp.bfloat16), w_fc, b_fc, w_proj, b_proj))
    assert out_bf_io.dtype == jnp.bfloat16
    assert jnp.allclose(out_bf_io.astype(jnp.float32), ref, atol=3e-2, rtol=3e-2)

    print("KERNEL_OK")
</pallas_src>

<mosaic_0001>
module attributes {stable_mosaic.version = 11 : i64} {
  func.func @kernel(%arg0: i32, %arg1: i32, %arg2: memref<8x32xf32, #tpu.memory_space<vmem>>, %arg3: memref<32x128xf32, #tpu.memory_space<vmem>>, %arg4: memref<1x128xf32, #tpu.memory_space<vmem>>, %arg5: memref<128x32xf32, #tpu.memory_space<vmem>>, %arg6: memref<1x32xf32, #tpu.memory_space<vmem>>, %arg7: memref<8x32xf32, #tpu.memory_space<vmem>>) attributes {dimension_semantics = [#tpu.dimension_semantics<parallel>, #tpu.dimension_semantics<arbitrary>], iteration_bounds = array<i64: 2, 1>, scalar_prefetch = 0 : i64, scratch_operands = 0 : i64, tpu.core_type = #tpu.core_type<tc>, window_params = [{transform_indices = @transform_0, window_bounds = array<i64: 8, 32>}, {pipeline_mode = #tpu.pipeline_mode<synchronous>, transform_indices = @transform_1, window_bounds = array<i64: 32, 128>}, {transform_indices = @transform_2, window_bounds = array<i64: 1, 128>}, {pipeline_mode = #tpu.pipeline_mode<synchronous>, transform_indices = @transform_3, window_bounds = array<i64: 128, 32>}, {pipeline_mode = #tpu.pipeline_mode<synchronous>, transform_indices = @transform_4, window_bounds = array<i64: 1, 32>}, {transform_indices = @transform_5, window_bounds = array<i64: 8, 32>}]} {
    %c0_i32 = arith.constant 0 : i32
    %0 = arith.cmpi eq, %arg1, %c0_i32 : i32
    %1 = arith.extui %0 : i1 to i32
    %c0_i32_0 = arith.constant 0 : i32
    %2 = arith.cmpi ne, %1, %c0_i32_0 : i32
    scf.if %2 {
      %cst_18 = arith.constant 0.000000e+00 : f32
      %35 = vector.broadcast %cst_18 : f32 to vector<8x32xf32>
      %c0_19 = arith.constant 0 : index
      %c0_20 = arith.constant 0 : index
      %36 = vector.load %arg7[%c0_19, %c0_20] : memref<8x32xf32, #tpu.memory_space<vmem>>, vector<8x32xf32>
      tpu.vector_store %arg7[%c0_19, %c0_20], %35 {strides = array<i32>} : memref<8x32xf32, #tpu.memory_space<vmem>>, vector<8x32xf32>,
    } else {
    }
    %c0 = arith.constant 0 : index
    %c0_1 = arith.constant 0 : index
    %3 = vector.load %arg2[%c0, %c0_1] : memref<8x32xf32, #tpu.memory_space<vmem>>, vector<8x32xf32>
    %c0_2 = arith.constant 0 : index
    %c0_3 = arith.constant 0 : index
    %4 = vector.load %arg4[%c0_2, %c0_3] : memref<1x128xf32, #tpu.memory_space<vmem>>, vector<1x128xf32>
    %c128_i32 = arith.constant 128 : i32
    %5 = arith.muli %arg1, %c128_i32 : i32
    %c0_i32_4 = arith.constant 0 : i32
    %6 = arith.addi %5, %c0_i32_4 : i32
    %7 = tpu.assume_multiple %6, 128 : i32
    %c0_5 = arith.constant 0 : index
    %8 = arith.index_cast %7 : i32 to index
    %9 = vector.load %arg3[%c0_5, %8] : memref<32x128xf32, #tpu.memory_space<vmem>>, vector<32x128xf32>
    %cst = arith.constant dense<0.000000e+00> : vector<8x128xf32>
    %10 = tpu.matmul %3, %9, %cst {dimension_numbers = #tpu.dot_dimension_numbers<[1], [0], [0], [1], [0, 0, 1, 1], [], []>} : vector<8x32xf32>, vector<32x128xf32>, vector<8x128xf32> -> vector<8x128xf32>
    %11 = vector.broadcast %4 : vector<1x128xf32> to vector<8x128xf32>
    %12 = arith.addf %10, %11 : vector<8x128xf32>
    %cst_6 = arith.constant 5.000000e-01 : f32
    %13 = vector.broadcast %cst_6 : f32 to vector<8x128xf32>
    %14 = arith.mulf %13, %12 : vector<8x128xf32>
    %15 = arith.mulf %12, %12 : vector<8x128xf32>
    %16 = arith.mulf %12, %15 : vector<8x128xf32>
    %cst_7 = arith.constant 4.471500e-02 : f32
    %17 = vector.broadcast %cst_7 : f32 to vector<8x128xf32>
    %18 = arith.mulf %17, %16 : vector<8x128xf32>
    %19 = arith.addf %12, %18 : vector<8x128xf32>
    %cst_8 = arith.constant 0.797884583 : f32
    %20 = vector.broadcast %cst_8 : f32 to vector<8x128xf32>
    %21 = arith.mulf %20, %19 : vector<8x128xf32>
    %22 = math.tanh %21 : vector<8x128xf32>
    %cst_9 = arith.constant 1.000000e+00 : f32
    %23 = vector.broadcast %cst_9 : f32 to vector<8x128xf32>
    %24 = arith.addf %23, %22 : vector<8x128xf32>
    %25 = arith.mulf %14, %24 : vector<8x128xf32>
    %26 = arith.index_cast %7 : i32 to index
    %c0_10 = arith.constant 0 : index
    %27 = vector.load %arg5[%26, %c0_10] : memref<128x32xf32, #tpu.memory_space<vmem>>, vector<128x32xf32>
    %c0_11 = arith.constant 0 : index
    %c0_12 = arith.constant 0 : index
    %28 = vector.load %arg7[%c0_11, %c0_12] : memref<8x32xf32, #tpu.memory_space<vmem>>, vector<8x32xf32>
    %cst_13 = arith.constant dense<0.000000e+00> : vector<8x32xf32>
    %29 = tpu.matmul %25, %27, %cst_13 {dimension_numbers = #tpu.dot_dimension_numbers<[1], [0], [0], [1], [0, 0, 1, 1], [], []>} : vector<8x128xf32>, vector<128x32xf32>, vector<8x32xf32> -> vector<8x32xf32>
    %30 = arith.addf %28, %29 : vector<8x32xf32>
    %c0_14 = arith.constant 0 : index
    %c0_15 = arith.constant 0 : index
    %31 = vector.load %arg7[%c0_14, %c0_15] : memref<8x32xf32, #tpu.memory_space<vmem>>, vector<8x32xf32>
    tpu.vector_store %arg7[%c0_14, %c0_15], %30 {strides = array<i32>} : memref<8x32xf32, #tpu.memory_space<vmem>>, vector<8x32xf32>,
    %c0_i32_16 = arith.constant 0 : i32
    %32 = arith.cmpi eq, %arg1, %c0_i32_16 : i32
    %33 = arith.extui %32 : i1 to i32
    %c0_i32_17 = arith.constant 0 : i32
    %34 = arith.cmpi ne, %33, %c0_i32_17 : i32
    scf.if %34 {
      %c0_18 = arith.constant 0 : index
      %c0_19 = arith.constant 0 : index
      %35 = vector.load %arg7[%c0_18, %c0_19] : memref<8x32xf32, #tpu.memory_space<vmem>>, vector<8x32xf32>
      %c0_20 = arith.constant 0 : index
      %c0_21 = arith.constant 0 : index
      %36 = vector.load %arg6[%c0_20, %c0_21] : memref<1x32xf32, #tpu.memory_space<vmem>>, vector<1x32xf32>
      %37 = vector.broadcast %36 : vector<1x32xf32> to vector<8x32xf32>
      %38 = arith.addf %35, %37 : vector<8x32xf32>
      %c0_22 = arith.constant 0 : index
      %c0_23 = arith.constant 0 : index
      %39 = vector.load %arg7[%c0_22, %c0_23] : memref<8x32xf32, #tpu.memory_space<vmem>>, vector<8x32xf32>
      tpu.vector_store %arg7[%c0_22, %c0_23], %38 {strides = array<i32>} : memref<8x32xf32, #tpu.memory_space<vmem>>, vector<8x32xf32>,
    } else {
    }
    return
  }
  func.func @transform_0(%arg0: i32, %arg1: i32) -> (i32, i32) {
    %c0_i32 = arith.constant 0 : i32
    %c0_i32_0 = arith.constant 0 : i32
    return %arg0, %c0_i32 : i32, i32
  }
  func.func @transform_1(%arg0: i32, %arg1: i32) -> (i32, i32) {
    %c0_i32 = arith.constant 0 : i32
    %c0_i32_0 = arith.constant 0 : i32
    %c0_i32_1 = arith.constant 0 : i32
    return %c0_i32, %c0_i32_0 : i32, i32
  }
  func.func @transform_2(%arg0: i32, %arg1: i32) -> (i32, i32) {
    %c0_i32 = arith.constant 0 : i32
    %c0_i32_0 = arith.constant 0 : i32
    return %c0_i32, %arg1 : i32, i32
  }
  func.func @transform_3(%arg0: i32, %arg1: i32) -> (i32, i32) {
    %c0_i32 = arith.constant 0 : i32
    %c0_i32_0 = arith.constant 0 : i32
    %c0_i32_1 = arith.constant 0 : i32
    return %c0_i32, %c0_i32_0 : i32, i32
  }
  func.func @transform_4(%arg0: i32, %arg1: i32) -> (i32, i32) {
    %c0_i32 = arith.constant 0 : i32
    %c0_i32_0 = arith.constant 0 : i32
    %c0_i32_1 = arith.constant 0 : i32
    return %c0_i32, %c0_i32_0 : i32, i32
  }
  func.func @transform_5(%arg0: i32, %arg1: i32) -> (i32, i32) {
    %c0_i32 = arith.constant 0 : i32
    %c0_i32_0 = arith.constant 0 : i32
    return %arg0, %c0_i32 : i32, i32
  }
}

</mosaic_0001>

<llo_original>
// kernel: tpu_custom_call.1
$region0: #{tpu_custom_call.1}
  #allocation0 [shape = 'u32[]', space=smem, size = 0x4, offset = 0x4, fixed_abs, tag = 'smem constant byte address 0x4 - core index']
  #allocation1 [shape = 'u32[144,128]{1,0:T(1,128)}', space=vmem, size = 0x12000, scoped, tag = 'internal scratch']
  %s0 = inlined_call_operand.vmem [shape: f32[16,32], index: 0, kind: input, shape index: {}]
  %s1 = inlined_call_operand.vmem [shape: f32[32,128], index: 1, kind: input, shape index: {}]
  %s2 = inlined_call_operand.vmem [shape: f32[1,128], index: 2, kind: input, shape index: {}]
  %s3 = inlined_call_operand.vmem [shape: f32[128,32], index: 3, kind: input, shape index: {}]
  %s4 = inlined_call_operand.vmem [shape: f32[1,32], index: 4, kind: input, shape index: {}]
  %s5 = inlined_call_operand.hbm [shape: f32[16,32], index: 5, kind: output, shape index: {}]
  %s6 = sld [smem:[#allocation0]]
  $region61: #{tpu_custom_call.1} parent=0
    _
  %s8 = ssub.s32 1, %s6
  %s9 = scalar_select 0, %s8, %s6
  $region1: #{tpu_custom_call.1} parent=0
    #allocation2 [shape = 'u8[8192]{0}', space=vmem, size = 0x2000, scoped, tag = 'output window, operand 0']
    #allocation3 [shape = 's32[2]{0}', space=sflag, size = 0x8, scoped, tag = 'scoped memory for tpu_custom_call.1']
    %10 = vsyncpa [#allocation3], 0
    %s11 = scalar_lea.sflag [#allocation3], 1
    %12 = vsyncpa %s11, 0
    loop: start=0, step=1, limit=4
    $region2: #{tpu_custom_call.1} parent=1 // loop_pre_header
      _
    $region3: #{tpu_custom_call.1} parent=1 // loop_header
      %s14 = sphi 0, %s18
      %p15 = scmp.ge.s32.totalorder %s14, 4
      %s21 = sphi 0, %s33
      %s22 = sphi 0, %s29
      %s23 = sphi 0, %s21
      %s24 = sphi 0, %s22
      %s25 = sphi 0, %s23
      %s26 = sphi 0, %s24
      %s36 = sphi 0, %s38
      %s39 = sphi 0, %s36
      %s40 = sphi 0, %s39
      %s56 = sphi 0, %s40
      %s60 = sphi 0, %s60
      %s62 = sphi 0, %s60
      %s63 = sphi 0, %s62
      %s77 = sphi 0, %s63
      %s83 = sphi 0, %s85
      %s86 = sphi 0, %s83
      %s87 = sphi 0, %s86
      %s103 = sphi 0, %s87
      %s107 = sphi 0, %s107
      %s109 = sphi 0, %s107
      %s110 = sphi 0, %s109
      %s124 = sphi 0, %s110
      %s128 = sphi 0, %s128
      %s130 = sphi 0, %s128
      %s131 = sphi 0, %s130
      %s145 = sphi 0, %s131
      %s151 = sphi 0, %s153
      %s154 = sphi 0, %s151
      %s155 = sphi 0, %s154
      %s171 = sphi 0, %s155
    $region4: #{tpu_custom_call.1} parent=1 // loop_header_branch
      %17 = sbr.rel (%p15) target = $region8
    $region5: #{tpu_custom_call.1} parent=1 // loop_body
      %s19 = ssub.s32 %s14, 1
      %s20 = ssub.s32 %s14, 2
      %s27 = sadd.s32 1, %s22
      %p28 = scmp.ge.s32.totalorder %s27, 1
      %s29 = scalar_select %p28, 0, %s27
      %s30 = sadd.s32 1, %s21
      %s31 = scalar_select %p28, %s30, %s21
      %p32 = scmp.ge.s32.totalorder %s31, 2
      %s33 = scalar_select %p32, 0, %s31
      %s34 = ssub.s32 %s21, %s33
      %p35 = scmp.eq.s32.totalorder %s34, 0
      %s37 = sadd.s32 %s36, 1
      %s38 = scalar_select %p35, %s36, %s37
      %p41 = pneg %p35
      %p42 = scmp.eq.s32.totalorder %s14, 1
      %p43 = por %p41, %p42
      %p44 = scmp.ne.s32.totalorder %s36, %s39
      %p45 = scmp.eq.s32.totalorder %s14, 0
      %p46 = por %p44, %p45
      %p47 = scmp.ne.s32.totalorder %s36, %s39
      %p48 = scmp.eq.s32.totalorder %s19, 1
      %p49 = por %p47, %p48
      %p50 = scmp.ne.s32.totalorder %s39, %s40
      %p51 = scmp.eq.s32.totalorder %s19, 0
      %p52 = por %p50, %p51
      %p53 = scmp.ne.s32.totalorder %s39, %s40
      %p54 = scmp.eq.s32.totalorder %s20, 1
      %p55 = por %p53, %p54
      %p57 = scmp.ne.s32.totalorder %s40, %s56
      %p58 = scmp.eq.s32.totalorder %s20, 0
      %p59 = por %p57, %p58
      %s61 = sadd.s32 %s60, 1
      %p64 = scmp.eq.s32.totalorder %s14, 1
      %p65 = scmp.ne.s32.totalorder %s60, %s62
      %p66 = scmp.eq.s32.totalorder %s14, 0
      %p67 = por %p65, %p66
      %p68 = scmp.ne.s32.totalorder %s60, %s62
      %p69 = scmp.eq.s32.totalorder %s19, 1
      %p70 = por %p68, %p69
      %p71 = scmp.ne.s32.totalorder %s62, %s63
      %p72 = scmp.eq.s32.totalorder %s19, 0
      %p73 = por %p71, %p72
      %p74 = scmp.ne.s32.totalorder %s62, %s63
      %p75 = scmp.eq.s32.totalorder %s20, 1
      %p76 = por %p74, %p75
      %p78 = scmp.ne.s32.totalorder %s63, %s77
      %p79 = scmp.eq.s32.totalorder %s20, 0
      %p80 = por %p78, %p79
      %s81 = ssub.s32 %s22, %s29
      %p82 = scmp.eq.s32.totalorder %s81, 0
      %s84 = sadd.s32 %s83, 1
      %s85 = scalar_select %p82, %s83, %s84
      %p88 = pneg %p82
      %p89 = scmp.eq.s32.totalorder %s14, 1
      %p90 = por %p88, %p89
      %p91 = scmp.ne.s32.totalorder %s83, %s86
      %p92 = scmp.eq.s32.totalorder %s14, 0
      %p93 = por %p91, %p92
      %p94 = scmp.ne.s32.totalorder %s83, %s86
      %p95 = scmp.eq.s32.totalorder %s19, 1
      %p96 = por %p94, %p95
      %p97 = scmp.ne.s32.totalorder %s86, %s87
      %p98 = scmp.eq.s32.totalorder %s19, 0
      %p99 = por %p97, %p98
      %p100 = scmp.ne.s32.totalorder %s86, %s87
      %p101 = scmp.eq.s32.totalorder %s20, 1
      %p102 = por %p100, %p101
      %p104 = scmp.ne.s32.totalorder %s87, %s103
      %p105 = scmp.eq.s32.totalorder %s20, 0
      %p106 = por %p104, %p105
      %s108 = sadd.s32 %s107, 1
      %p111 = scmp.eq.s32.totalorder %s14, 1
      %p112 = scmp.ne.s32.totalorder %s107, %s109
      %p113 = scmp.eq.s32.totalorder %s14, 0
      %p114 = por %p112, %p113
      %p115 = scmp.ne.s32.totalorder %s107, %s109
      %p116 = scmp.eq.s32.totalorder %s19, 1
      %p117 = por %p115, %p116
      %p118 = scmp.ne.s32.totalorder %s109, %s110
      %p119 = scmp.eq.s32.totalorder %s19, 0
      %p120 = por %p118, %p119
      %p121 = scmp.ne.s32.totalorder %s109, %s110
      %p122 = scmp.eq.s32.totalorder %s20, 1
      %p123 = por %p121, %p122
      %p125 = scmp.ne.s32.totalorder %s110, %s124
      %p126 = scmp.eq.s32.totalorder %s20, 0
      %p127 = por %p125, %p126
      %s129 = sadd.s32 %s128, 1
      %p132 = scmp.eq.s32.totalorder %s14, 1
      %p133 = scmp.ne.s32.totalorder %s128, %s130
      %p134 = scmp.eq.s32.totalorder %s14, 0
      %p135 = por %p133, %p134
      %p136 = scmp.ne.s32.totalorder %s128, %s130
      %p137 = scmp.eq.s32.totalorder %s19, 1
      %p138 = por %p136, %p137
      %p139 = scmp.ne.s32.totalorder %s130, %s131
      %p140 = scmp.eq.s32.totalorder %s19, 0
      %p141 = por %p139, %p140
      %p142 = scmp.ne.s32.totalorder %s130, %s131
      %p143 = scmp.eq.s32.totalorder %s20, 1
      %p144 = por %p142, %p143
      %p146 = scmp.ne.s32.totalorder %s131, %s145
      %p147 = scmp.eq.s32.totalorder %s20, 0
      %p148 = por %p146, %p147
      %s149 = ssub.s32 %s21, %s33
      %p150 = scmp.eq.s32.totalorder %s149, 0
      %s152 = sadd.s32 %s151, 1
      %s153 = scalar_select %p150, %s151, %s152
      %p156 = pneg %p150
      %p157 = scmp.eq.s32.totalorder %s14, 1
      %p158 = por %p156, %p157
      %p159 = scmp.ne.s32.totalorder %s151, %s154
      %p160 = scmp.eq.s32.totalorder %s14, 0
      %p161 = por %p159, %p160
      %p162 = scmp.ne.s32.totalorder %s151, %s154
      %p163 = scmp.eq.s32.totalorder %s19, 1
      %p164 = por %p162, %p163
      %p165 = scmp.ne.s32.totalorder %s154, %s155
      %p166 = scmp.eq.s32.totalorder %s19, 0
      %p167 = por %p165, %p166
      %p168 = scmp.ne.s32.totalorder %s154, %s155
      %p169 = scmp.eq.s32.totalorder %s20, 1
      %p170 = por %p168, %p169
      %p172 = scmp.ne.s32.totalorder %s155, %s171
      %p173 = scmp.eq.s32.totalorder %s20, 0
      %p174 = por %p172, %p173
      %p175 = scmp.le.s32.totalorder 1, %s14
      %p176 = scmp.lt.s32.totalorder %s14, 3
      %p177 = pnand %p175, %p176
      %p178 = pneg %p177
      // Predicated region
      $region9: #{tpu_custom_call.1} parent=5 // pred_check
        _
      $region10: #{tpu_custom_call.1} parent=5 // pred_check_branch
        %180 = sbr.rel (%p177) target = $region12
      $region11: #{tpu_custom_call.1} parent=5 // pred_region
        %s181 = ssub.s32 %s14, 1
        // Predicated region
        $region13: #{tpu_custom_call.1} parent=11 // pred_check
          %p182 = pneg %p73
        $region14: #{tpu_custom_call.1} parent=11 // pred_check_branch
          %184 = sbr.rel (%p182) target = $region16
        $region15: #{tpu_custom_call.1} parent=11 // pred_region
          _
        $region16: #{tpu_custom_call.1} parent=11 // pred_fallthru
          _
        // Predicated region
        $region17: #{tpu_custom_call.1} parent=11 // pred_check
          %p185 = pneg %p99
        $region18: #{tpu_custom_call.1} parent=11 // pred_check_branch
          %187 = sbr.rel (%p185) target = $region20
        $region19: #{tpu_custom_call.1} parent=11 // pred_region
          %p188 = scmp.lt.s32.totalorder %s24, 0
          %s189 = scalar_select %p188, %s24, 0
          %s190 = scalar_lea.vmem %s2, %s189
        $region20: #{tpu_custom_call.1} parent=11 // pred_fallthru
          _
        // Predicated region
        $region21: #{tpu_custom_call.1} parent=11 // pred_check
          %p191 = pneg %p120
        $region22: #{tpu_custom_call.1} parent=11 // pred_check_branch
          %193 = sbr.rel (%p191) target = $region24
        $region23: #{tpu_custom_call.1} parent=11 // pred_region
          _
        $region24: #{tpu_custom_call.1} parent=11 // pred_fallthru
          _
        // Predicated region
        $region25: #{tpu_custom_call.1} parent=11 // pred_check
          %p194 = pneg %p141
        $region26: #{tpu_custom_call.1} parent=11 // pred_check_branch
          %196 = sbr.rel (%p194) target = $region28
        $region27: #{tpu_custom_call.1} parent=11 // pred_region
          _
        $region28: #{tpu_custom_call.1} parent=11 // pred_fallthru
          _
      $region12: #{tpu_custom_call.1} parent=5 // pred_fallthru
        _
      %p197 = scmp.lt.s32.totalorder %s14, 2
      // Predicated region
      $region29: #{tpu_custom_call.1} parent=5 // pred_check
        %p198 = pneg %p197
      $region30: #{tpu_custom_call.1} parent=5 // pred_check_branch
        %200 = sbr.rel (%p198) target = $region32
      $region31: #{tpu_custom_call.1} parent=5 // pred_region
        // Predicated region
        $region33: #{tpu_custom_call.1} parent=31 // pred_check
          %p201 = pneg %p46
        $region34: #{tpu_custom_call.1} parent=31 // pred_check_branch
          %203 = sbr.rel (%p201) target = $region36
        $region35: #{tpu_custom_call.1} parent=31 // pred_region
          %p204 = scmp.lt.s32.totalorder %s21, 1
          %s205 = scalar_select %p204, %s21, 1
          %s206 = smul.addr %s205, 8
          %s207 = scalar_lea.vmem %s0, %s206
        $region36: #{tpu_custom_call.1} parent=31 // pred_fallthru
          _
      $region32: #{tpu_custom_call.1} parent=5 // pred_fallthru
        _
      %p208 = scmp.le.s32.totalorder 1, %s14
      %p209 = scmp.lt.s32.totalorder %s14, 3
      %p210 = pnand %p208, %p209
      %p211 = pneg %p210
      // Predicated region
      $region37: #{tpu_custom_call.1} parent=5 // pred_check
        _
      $region38: #{tpu_custom_call.1} parent=5 // pred_check_branch
        %213 = sbr.rel (%p210) target = $region40
      $region39: #{tpu_custom_call.1} parent=5 // pred_region
        %s214 = ssub.s32 %s14, 1
        %p215 = scmp.lt.s32.totalorder %s23, 1
        %s216 = scalar_select %p215, %s23, 1
        %s217 = smul.addr %s216, 8
        %s218 = scalar_lea.vmem %s0, %s217
        %p219 = pneg %p52
        %p220 = pneg %p49
        %p221 = pneg %p73
        %p222 = pneg %p70
        %p223 = scmp.lt.s32.totalorder %s24, 0
        %s224 = scalar_select %p223, %s24, 0
        %s225 = scalar_lea.vmem %s2, %s224
        %p226 = pneg %p99
        %p227 = pneg %p96
        %p228 = pneg %p120
        %p229 = pneg %p117
        %p230 = pneg %p141
        %p231 = pneg %p138
        %p232 = pneg %p167
        %p233 = pneg %p164
        %s234 = sand.u32 %s154, 1
        %s235 = scalar_lea.sflag [#allocation3], %s234
        %s236 = sand.u32 %s154, 1
        %s237 = smul.addr %s236, 8
        %s238 = scalar_lea.vmem [#allocation2], %s237
        %p239 = scmp.lt.s32.totalorder %s23, 1
        %s240 = scalar_select %p239, %s23, 1
        %s241 = smul.addr %s240, 8
        %s242 = scalar_lea.vmem %s0, %s241
        %p243 = scmp.lt.s32.totalorder %s24, 0
        %s244 = scalar_select %p243, %s24, 0
        %s245 = scalar_lea.vmem %s2, %s244
        %p246 = scmp.eq.s32.totalorder %s24, 0
        // Predicated region
        $region41: #{tpu_custom_call.1} parent=39 // pred_check
          %p247 = pneg %p246
        $region42: #{tpu_custom_call.1} parent=39 // pred_check_branch
          %249 = sbr.rel (%p247) target = $region44
        $region43: #{tpu_custom_call.1} parent=39 // pred_region
          %vm250 = vcmask 261120
          %251 = vst.msk [vmem:[%s238] sm:$0xff] %vm250, 0.0
        $region44: #{tpu_custom_call.1} parent=39 // pred_fallthru
          _
        %v252 = vld [vmem:[%s242] sm:$0xff]
        %v253 = vld [vmem:[%s245] sm:$0x1]
        %s254 = smul.u32 %s24, 128
        %s255 = sshra.s32 %s254, 7
        %s256 = sand.u32 %s254, 127
        %s257 = scalar_lea.vmem %s1, %s255
        %v258 = vld [vmem:[%s257] sm:$0xff]
        %v259 = vld [vmem:[%s257 + $0x8] sm:$0xff]
        %v260 = vld [vmem:[%s257 + $0x10] sm:$0xff]
        %v261 = vld [vmem:[%s257 + $0x18] sm:$0xff]
        %v263 = vlaneseq
        %v264 = vshrl.u32 %v263, 7
        %v265 = vsub.s32 0, %v264
        %v266 = vrot.slane %v253, %v265
        %vm268 = vcmask 261120
        %v270 = vsel %vm268, %v252, 0
        %272 = vmatprep.subr.mxu0 0.0
        %273 = vmatpush1.msra.mxu0 %v258
        %274 = vmatprep.subr.mxu0 0.0
        %275 = vmatpush1.msra.mxu0 %v259
        %276 = vmatprep.subr.mxu0 0.0
        %277 = vmatpush1.msra.mxu0 %v260
        %278 = vmatprep.subr.mxu0 0.0
        %279 = vmatpush1.msra.mxu0 %v261
        %280 = vmatprep.subr.mxu0 0.0
        %281 = vmatpush1.msra.mxu0 0.0
        %282 = vmatprep.subr.mxu0 0.0
        %283 = vmatpush1.msra.mxu0 0.0
        %284 = vmatprep.subr.mxu0 0.0
        %285 = vmatpush1.msra.mxu0 0.0
        %286 = vmatprep.subr.mxu0 0.0
        %287 = vmatpush1.msra.mxu0 0.0
        %288 = vmatprep.subr.mxu0 0.0
        %289 = vmatpush1.msra.mxu0 0.0
        %290 = vmatprep.subr.mxu0 0.0
        %291 = vmatpush1.msra.mxu0 0.0
        %292 = vmatprep.subr.mxu0 0.0
        %293 = vmatpush1.msra.mxu0 0.0
        %294 = vmatprep.subr.mxu0 0.0
        %295 = vmatpush1.msra.mxu0 0.0
        %296 = vmatprep.subr.mxu0 0.0
        %297 = vmatpush1.msra.mxu0 0.0
        %298 = vmatprep.subr.mxu0 0.0
        %299 = vmatpush1.msra.mxu0 0.0
        %300 = vmatprep.subr.mxu0 0.0
        %301 = vmatpush1.msra.mxu0 0.0
        %302 = vmatprep.subr.mxu0 0.0
        %303 = vmatpush1.msra.mxu0 0.0
        %304 = vmatprep.subr.mxu0 0.0
        %305 = vmatpush1.msra.mxu0 0.0
        %306 = vmatprep.subr.mxu0 0.0
        %307 = vmatpush1.msra.mxu0 0.0
        %308 = vmatprep.subr.mxu0 0.0
        %309 = vmatpush1.msra.mxu0 0.0
        %310 = vmatprep.subr.mxu0 0.0
        %311 = vmatpush1.msra.mxu0 0.0
        %312 = vmatprep.subr.mxu0 0.0
        %313 = vmatpush1.msra.mxu0 0.0
        %314 = vmatprep.subr.mxu0 0.0
        %315 = vmatpush1.msra.mxu0 0.0
        %316 = vmatprep.subr.mxu0 0.0
        %317 = vmatpush1.msra.mxu0 0.0
        %318 = vmatprep.subr.mxu0 0.0
        %319 = vmatpush1.msra.mxu0 0.0
        %320 = vmatprep.subr.mxu0 0.0
        %321 = vmatpush1.msra.mxu0 0.0
        %322 = vmatprep.subr.mxu0 0.0
        %323 = vmatpush1.msra.mxu0 0.0
        %324 = vmatprep.subr.mxu0 0.0
        %325 = vmatpush1.msra.mxu0 0.0
        %326 = vmatprep.subr.mxu0 0.0
        %327 = vmatpush1.msra.mxu0 0.0
        %328 = vmatprep.subr.mxu0 0.0
        %329 = vmatpush1.msra.mxu0 0.0
        %330 = vmatprep.subr.mxu0 0.0
        %331 = vmatpush1.msra.mxu0 0.0
        %332 = vmatprep.subr.mxu0 0.0
        %333 = vmatpush1.msra.mxu0 0.0
        %334 = vmatprep.subr.mxu0 0.0
        %335 = vmatpush1.msra.mxu0 0.0
        %336 = vmatprep.mubr.f32.mxu0 0.0
        %337 = vmatmul.mubr.f32.gmra.mrb[0].mxu0 %v270
        %v338 = vpop.f32.mrb[0].mxu0
        %v339 = vadd.f32 %v266, %v338
        %v340 = vpop.f32.mrb[0].mxu0
        %341 = vdwg.mxu0
        %v342 = vmul.f32 %v339, 0.5
        %v343 = vmul.f32 %v339, %v339
        %v344 = vmul.f32 %v339, %v343
        %v345 = vmul.f32 %v344, 0.044715
        %v346 = vadd.f32 %v339, %v345
        %v347 = vmul.f32 %v346, 0.7978846
        %v348 = vtanh.pop %v347
        %v349 = vadd.f32 %v348, 1.0
        %v350 = vmul.f32 %v342, %v349
        %s351 = scalar_lea.vmem %s3, %s254
        %v352 = vld [vmem:[%s351] sm:$0xff]
        %v353 = vld [vmem:[%s351 + $0x8] sm:$0xff]
        %v354 = vld [vmem:[%s351 + $0x10] sm:$0xff]
        %v355 = vld [vmem:[%s351 + $0x18] sm:$0xff]
        %v356 = vld [vmem:[%s351 + $0x20] sm:$0xff]
        %v357 = vld [vmem:[%s351 + $0x28] sm:$0xff]
        %v358 = vld [vmem:[%s351 + $0x30] sm:$0xff]
        %v359 = vld [vmem:[%s351 + $0x38] sm:$0xff]
        %v360 = vld [vmem:[%s351 + $0x40] sm:$0xff]
        %v361 = vld [vmem:[%s351 + $0x48] sm:$0xff]
        %v362 = vld [vmem:[%s351 + $0x50] sm:$0xff]
        %v363 = vld [vmem:[%s351 + $0x58] sm:$0xff]
        %v364 = vld [vmem:[%s351 + $0x60] sm:$0xff]
        %v365 = vld [vmem:[%s351 + $0x68] sm:$0xff]
        %v366 = vld [vmem:[%s351 + $0x70] sm:$0xff]
        %v367 = vld [vmem:[%s351 + $0x78] sm:$0xff]
        %v368 = vld [vmem:[%s238] sm:$0xff]
        %369 = vmatprep.subr.mxu0 0.0
        %370 = vmatpush1.msra.mxu0 %v352
        %371 = vmatprep.subr.mxu0 0.0
        %372 = vmatpush1.msra.mxu0 %v353
        %373 = vmatprep.subr.mxu0 0.0
        %374 = vmatpush1.msra.mxu0 %v354
        %375 = vmatprep.subr.mxu0 0.0
        %376 = vmatpush1.msra.mxu0 %v355
        %377 = vmatprep.subr.mxu0 0.0
        %378 = vmatpush1.msra.mxu0 %v356
        %379 = vmatprep.subr.mxu0 0.0
        %380 = vmatpush1.msra.mxu0 %v357
        %381 = vmatprep.subr.mxu0 0.0
        %382 = vmatpush1.msra.mxu0 %v358
        %383 = vmatprep.subr.mxu0 0.0
        %384 = vmatpush1.msra.mxu0 %v359
        %385 = vmatprep.subr.mxu0 0.0
        %386 = vmatpush1.msra.mxu0 %v360
        %387 = vmatprep.subr.mxu0 0.0
        %388 = vmatpush1.msra.mxu0 %v361
        %389 = vmatprep.subr.mxu0 0.0
        %390 = vmatpush1.msra.mxu0 %v362
        %391 = vmatprep.subr.mxu0 0.0
        %392 = vmatpush1.msra.mxu0 %v363
        %393 = vmatprep.subr.mxu0 0.0
        %394 = vmatpush1.msra.mxu0 %v364
        %395 = vmatprep.subr.mxu0 0.0
        %396 = vmatpush1.msra.mxu0 %v365
        %397 = vmatprep.subr.mxu0 0.0
        %398 = vmatpush1.msra.mxu0 %v366
        %399 = vmatprep.subr.mxu0 0.0
        %400 = vmatpush1.msra.mxu0 %v367
        %401 = vmatprep.subr.mxu0 0.0
        %402 = vmatpush1.msra.mxu0 0.0
        %403 = vmatprep.subr.mxu0 0.0
        %404 = vmatpush1.msra.mxu0 0.0
        %405 = vmatprep.subr.mxu0 0.0
        %406 = vmatpush1.msra.mxu0 0.0
        %407 = vmatprep.subr.mxu0 0.0
        %408 = vmatpush1.msra.mxu0 0.0
        %409 = vmatprep.subr.mxu0 0.0
        %410 = vmatpush1.msra.mxu0 0.0
        %411 = vmatprep.subr.mxu0 0.0
        %412 = vmatpush1.msra.mxu0 0.0
        %413 = vmatprep.subr.mxu0 0.0
        %414 = vmatpush1.msra.mxu0 0.0
        %415 = vmatprep.subr.mxu0 0.0
        %416 = vmatpush1.msra.mxu0 0.0
        %417 = vmatprep.subr.mxu0 0.0
        %418 = vmatpush1.msra.mxu0 0.0
        %419 = vmatprep.subr.mxu0 0.0
        %420 = vmatpush1.msra.mxu0 0.0
        %421 = vmatprep.subr.mxu0 0.0
        %422 = vmatpush1.msra.mxu0 0.0
        %423 = vmatprep.subr.mxu0 0.0
        %424 = vmatpush1.msra.mxu0 0.0
        %425 = vmatprep.subr.mxu0 0.0
        %426 = vmatpush1.msra.mxu0 0.0
        %427 = vmatprep.subr.mxu0 0.0
        %428 = vmatpush1.msra.mxu0 0.0
        %429 = vmatprep.subr.mxu0 0.0
        %430 = vmatpush1.msra.mxu0 0.0
        %431 = vmatprep.subr.mxu0 0.0
        %432 = vmatpush1.msra.mxu0 0.0
        %433 = vmatprep.mubr.f32.mxu0 0.0
        %434 = vmatmul.mubr.f32.gmra.mrb[0].mxu0 %v350
        %v435 = vpop.f32.mrb[0].mxu0
        %v436 = vadd.f32 0.0, %v435
        %v437 = vpop.f32.mrb[0].mxu0
        %438 = vdwg.mxu0
        %v439 = vadd.f32 %v368, %v436
        %440 = vst.msk [vmem:[%s238] sm:$0xff] %vm268, %v439
        // Predicated region
        $region45: #{tpu_custom_call.1} parent=39 // pred_check
          %p441 = pneg %p246
        $region46: #{tpu_custom_call.1} parent=39 // pred_check_branch
          %443 = sbr.rel (%p441) target = $region48
        $region47: #{tpu_custom_call.1} parent=39 // pred_region
          %v444 = vld [vmem:[%s238] sm:$0xff]
          %v445 = vld [vmem:[%s4] sm:$0x1]
          %v447 = vlaneseq
          %v448 = vshrl.u32 %v447, 7
          %v449 = vsub.s32 0, %v448
          %v450 = vrot.slane %v445, %v449
          %v452 = vadd.f32 %v444, %v450
          %453 = vst.msk [vmem:[%s238] sm:$0xff] %vm268, %v452
        $region48: #{tpu_custom_call.1} parent=39 // pred_fallthru
          _
        %s454 = sand.u32 %s154, 1
        %s455 = scalar_lea.sflag [#allocation3], %s454
        %s456 = sand.u32 %s154, 1
        %s457 = smul.addr %s456, 8
        %s458 = scalar_lea.vmem [#allocation2], %s457
        // Predicated region
        $region49: #{tpu_custom_call.1} parent=39 // pred_check
          %p459 = pneg %p164
        $region50: #{tpu_custom_call.1} parent=39 // pred_check_branch
          %461 = sbr.rel (%p459) target = $region52
        $region51: #{tpu_custom_call.1} parent=39 // pred_region
          %s463 = ssub.s32 128, 128
          %464 = vsyncadd %s455, %s463
          %s465 = smul.addr %s23, 128
          %s466 = scalar_lea.hbm %s5, %s465
          %s468 = sshll.u32 %s458, 4
          %s469 = int_to_ptr.vmem [resolvable:$true] %s468
          %471 = dma.vmem_to_hbm [thread:$0]  %s469, 128, %s466, %s455
        $region52: #{tpu_custom_call.1} parent=39 // pred_fallthru
          _
      $region40: #{tpu_custom_call.1} parent=5 // pred_fallthru
        _
      %p472 = scmp.le.s32.totalorder 2, %s14
      // Predicated region
      $region53: #{tpu_custom_call.1} parent=5 // pred_check
        %p473 = pneg %p472
      $region54: #{tpu_custom_call.1} parent=5 // pred_check_branch
        %475 = sbr.rel (%p473) target = $region56
      $region55: #{tpu_custom_call.1} parent=5 // pred_region
        %s476 = ssub.s32 %s14, 2
        // Predicated region
        $region57: #{tpu_custom_call.1} parent=55 // pred_check
          %p477 = pneg %p170
        $region58: #{tpu_custom_call.1} parent=55 // pred_check_branch
          %479 = sbr.rel (%p477) target = $region60
        $region59: #{tpu_custom_call.1} parent=55 // pred_region
          %s480 = sand.u32 %s155, 1
          %s481 = scalar_lea.sflag [#allocation3], %s480
          %s482 = sand.u32 %s155, 1
          %s483 = smul.addr %s482, 8
          %s484 = scalar_lea.vmem [#allocation2], %s483
          %485 = dma.done %s481, 128
        $region60: #{tpu_custom_call.1} parent=55 // pred_fallthru
          _
      $region56: #{tpu_custom_call.1} parent=5 // pred_fallthru
        _
    $region6: #{tpu_custom_call.1} parent=1 // loop_footer
      %s18 = sadd.s32 1, %s14
    $region7: #{tpu_custom_call.1} parent=1 // loop_footer_branch
      %13 = sbr.rel target = $region3
    $region8: #{tpu_custom_call.1} parent=1 // loop_exit
      _
    %486 = vsyncpa [#allocation3], 1
    %s487 = scalar_lea.sflag [#allocation3], 1
    %488 = vsyncpa %s487, 1

</llo_original>
